<compile_context>
chip_gen: v7x
topology: tpu7x:2x2x1
jax: 0.10.0
libtpu: 0.0.40
codegen_flags: <defaults>
</compile_context>

<pallas_src>
import functools
import math

import jax
import jax.numpy as jnp
from jax import lax
from jax.experimental import pallas as pl
from jax.experimental.pallas import tpu as pltpu

EXPANSION = 4  # Bottleneck expansion


def _round_up(x, m):
    return ((x + m - 1) // m) * m


def _largest_block(nblk, max_blocks):
    """Largest b <= max_blocks that exactly divides nblk (1 always works)."""
    for b in range(max_blocks, 0, -1):
        if nblk % b == 0:
            return b
    return 1


# ----------------------------------------------------------------------------
# Pallas GEMM kernel: bf16 MXU, f32 accumulator, fused bias (+residual) (+ReLU)
# ----------------------------------------------------------------------------
def _gemm_kernel(*refs, relu, has_res, nsteps):
    if has_res:
        a_ref, b_ref, t_ref, r_ref, o_ref, acc_ref = refs
    else:
        a_ref, b_ref, t_ref, o_ref, acc_ref = refs
        r_ref = None
    k = pl.program_id(2)

    @pl.when(k == 0)
    def _():
        acc_ref[...] = jnp.zeros_like(acc_ref)

    acc_ref[...] += jnp.dot(a_ref[...], b_ref[...],
                            preferred_element_type=jnp.float32)

    @pl.when(k == nsteps - 1)
    def _():
        y = acc_ref[...] + t_ref[...]                    # f32 epilogue (v5e-safe)
        if r_ref is not None:
            y = y + r_ref[...].astype(jnp.float32)
        if relu:
            y = jnp.maximum(y, 0.0)
        o_ref[...] = y.astype(o_ref.dtype)


def gemm_bias_act(a, b_pad, bias_row, n_out, *, relu, residual=None):
    """out = act(a @ b_pad + bias [+ residual])[:M, :n_out], bf16 in/out, f32 acc.

    a:        (M, K)        activations (cast to bf16 here)
    b_pad:    (K128, N128)  bf16 weight, BN scale folded, pre-padded to x128
    bias_row: (1, N128)     f32 folded BN bias
    """
    M, K = a.shape
    K128, N128 = b_pad.shape
    assert K128 == _round_up(K, 128)

    tk = 128 * _largest_block(K128 // 128, 8)     # up to 1024 (fewer K steps)
    tn = 128 * _largest_block(N128 // 128, 2)     # up to 256  (feed 256x256 MXU)
    Mp8 = _round_up(M, 8)
    if Mp8 <= 256:
        tm, Mp = Mp8, Mp8                          # small M: single exact tile
    else:
        tm = 256
        Mp = _round_up(M, tm)
    nsteps = K128 // tk

    a_p = a.astype(jnp.bfloat16)
    if (Mp, K128) != (M, K):
        a_p = jnp.pad(a_p, ((0, Mp - M), (0, K128 - K)))

    # Deeper B buffering for skinny-M / deep-K GEMMs (DMA-latency bound tail layers).
    if Mp // tm == 1 and nsteps >= 3:
        b_spec = pl.BlockSpec((tk, tn), lambda i, j, k: (k, j),
                              pipeline_mode=pl.Buffered(3))
    else:
        b_spec = pl.BlockSpec((tk, tn), lambda i, j, k: (k, j))

    operands = [a_p, b_pad, bias_row]
    in_specs = [
        pl.BlockSpec((tm, tk), lambda i, j, k: (i, k)),
        b_spec,
        pl.BlockSpec((1, tn), lambda i, j, k: (0, j)),
    ]
    if residual is not None:
        r_p = residual.astype(jnp.bfloat16)
        if r_p.shape != (Mp, N128):
            r_p = jnp.pad(r_p, ((0, Mp - r_p.shape[0]), (0, N128 - r_p.shape[1])))
        operands.append(r_p)
        in_specs.append(pl.BlockSpec((tm, tn), lambda i, j, k: (i, j)))

    kernel = functools.partial(_gemm_kernel, relu=relu,
                               has_res=residual is not None, nsteps=nsteps)
    out = pl.pallas_call(
        kernel,
        out_shape=jax.ShapeDtypeStruct((Mp, N128), jnp.bfloat16),
        grid_spec=pltpu.PrefetchScalarGridSpec(
            num_scalar_prefetch=0,
            grid=(Mp // tm, N128 // tn, nsteps),
            in_specs=in_specs,
            out_specs=pl.BlockSpec((tm, tn), lambda i, j, k: (i, j)),
            scratch_shapes=[pltpu.VMEM((tm, tn), jnp.float32)],
        ),
        compiler_params=pltpu.CompilerParams(
            dimension_semantics=("parallel", "parallel", "arbitrary"),
            vmem_limit_bytes=48 * 1024 * 1024),   # explicit budget (v7x: 64 MiB phys)
    )(*operands)
    return out[:M, :n_out]


# ----------------------------------------------------------------------------
# Conv3d (+folded BN) in channels-last NDHWC, with a 1x1x1 fast path
# ----------------------------------------------------------------------------
def conv3d_bn(x, p, *, stride, padding, relu, residual=None):
    """x: (N,D,H,W,C) bf16 -> (N,Do,Ho,Wo,Cout) bf16."""
    N, D, H, W, Cin = x.shape
    kd, kh, kw = p['ksize']
    sd, sh, sw = stride
    pd, ph, pw = padding

    if (kd, kh, kw) == (1, 1, 1):
        # 1x1x1 fast path: no im2col, stride via slicing, pure GEMM.
        xs = x if stride == (1, 1, 1) else x[:, ::sd, ::sh, ::sw, :]
        Do, Ho, Wo = xs.shape[1], xs.shape[2], xs.shape[3]
        a = xs.reshape(N * Do * Ho * Wo, Cin)
    else:
        xp = x
        if (pd, ph, pw) != (0, 0, 0):
            xp = jnp.pad(x, ((0, 0), (pd, pd), (ph, ph), (pw, pw), (0, 0)))
        Dp, Hp, Wp = xp.shape[1], xp.shape[2], xp.shape[3]
        Do = (Dp - kd) // sd + 1
        Ho = (Hp - kh) // sh + 1
        Wo = (Wp - kw) // sw + 1
        slices = []
        for dk in range(kd):
            for hk in range(kh):
                for wk in range(kw):
                    s = lax.slice(
                        xp,
                        (0, dk, hk, wk, 0),
                        (N, dk + (Do - 1) * sd + 1, hk + (Ho - 1) * sh + 1,
                         wk + (Wo - 1) * sw + 1, Cin),
                        (1, sd, sh, sw, 1))
                    slices.append(s)
        pat = jnp.stack(slices, axis=4)          # (N,Do,Ho,Wo,Kk,C): K order (kd,kh,kw,C)
        a = pat.reshape(N * Do * Ho * Wo, kd * kh * kw * Cin)

    res2d = None
    if residual is not None:
        res2d = residual.reshape(-1, p['cout'])  # channels-last flatten, no transpose
    out = gemm_bias_act(a, p['w'], p['b'], p['cout'], relu=relu, residual=res2d)
    return out.reshape(N, Do, Ho, Wo, p['cout'])


# ----------------------------------------------------------------------------
# MaxPool3d: channels-last, window-major stacking (no HBM transpose), Pallas max
# ----------------------------------------------------------------------------
def _maxpool_kernel(x_ref, o_ref):
    o_ref[...] = jnp.max(x_ref[...], axis=0, keepdims=True)


def maxpool3d(x, ksize, stride, padding):
    """x: (N,D,H,W,C) -> (N,Do,Ho,Wo,C), window max."""
    kd, kh, kw = ksize
    sd, sh, sw = stride
    pd, ph, pw = padding
    neg = float(jnp.finfo(x.dtype).min)
    N, D, H, W, C = x.shape
    xp = jnp.pad(x, ((0, 0), (pd, pd), (ph, ph), (pw, pw), (0, 0)),
                 constant_values=neg)
    Dp, Hp, Wp = xp.shape[1], xp.shape[2], xp.shape[3]
    Do = (Dp - kd) // sd + 1
    Ho = (Hp - kh) // sh + 1
    Wo = (Wp - kw) // sw + 1
    slices = []
    for dk in range(kd):
        for hk in range(kh):
            for wk in range(kw):
                s = lax.slice(
                    xp,
                    (0, dk, hk, wk, 0),
                    (N, dk + (Do - 1) * sd + 1, hk + (Ho - 1) * sh + 1,
                     wk + (Wo - 1) * sw + 1, C),
                    (1, sd, sh, sw, 1))
                slices.append(s.reshape(1, -1))
    cols = jnp.concatenate(slices, axis=0)       # (Kk, M*C) — already window-major
    Kk, MC = cols.shape
    tile = min(2048, _round_up(MC, 128))
    MCp = _round_up(MC, tile)
    if MCp != MC:
        cols = jnp.pad(cols, ((0, 0), (0, MCp - MC)), constant_values=neg)
    out = pl.pallas_call(
        _maxpool_kernel,
        out_shape=jax.ShapeDtypeStruct((1, MCp), x.dtype),
        grid_spec=pltpu.PrefetchScalarGridSpec(
            num_scalar_prefetch=0,
            grid=(MCp // tile,),
            in_specs=[pl.BlockSpec((Kk, tile), lambda i: (0, i))],
            out_specs=pl.BlockSpec((1, tile), lambda i: (0, i)),
        ),
        compiler_params=pltpu.CompilerParams(dimension_semantics=("parallel",)),
    )(cols)
    return out[0, :MC].reshape(N, Do, Ho, Wo, C)


# ----------------------------------------------------------------------------
# Parameter construction: Conv3d kaiming init + BN(init) folded into bf16 GEMM weight
# ----------------------------------------------------------------------------
def kaiming_conv(key, cout, cin, kd, kh, kw):
    fan_out = cout * kd * kh * kw                # kaiming_normal(mode='fan_out')
    std = math.sqrt(2.0 / fan_out)
    return jax.random.normal(key, (cout, cin, kd, kh, kw), jnp.float32) * std


def make_conv_bn(key, cout, cin, ksize, eps=1e-5):
    """Conv3d (no bias) + BatchNorm3d at PyTorch init, pre-folded / pre-padded."""
    kd, kh, kw = ksize
    w = kaiming_conv(key, cout, cin, kd, kh, kw)
    # BN init: gamma=1, beta=0, running_mean=0, running_var=1 (inference fold)
    scale = 1.0 / jnp.sqrt(jnp.ones((cout,), jnp.float32) + eps)
    bias = jnp.zeros((cout,), jnp.float32)       # beta - mean*scale
    # Fold scale into weight; reorder K as (kd,kh,kw,Cin) to match channels-last im2col.
    wm = (w * scale[:, None, None, None, None]).transpose(2, 3, 4, 1, 0)
    K = kd * kh * kw * cin
    K128, N128 = _round_up(K, 128), _round_up(cout, 128)
    b_mat = jnp.pad(wm.reshape(K, cout),
                    ((0, K128 - K), (0, N128 - cout))).astype(jnp.bfloat16)
    bias_row = jnp.pad(bias, (0, N128 - cout)).reshape(1, N128).astype(jnp.float32)
    return {'w': b_mat, 'b': bias_row, 'ksize': ksize, 'cout': cout}


def build_resnet_params(key, layers, kernels):
    keys = iter(jax.random.split(key, 4 * sum(layers) + 4))
    params = {}
    k0 = kernels[0][0]
    params['conv1'] = make_conv_bn(next(keys), 64, 3, (k0, 7, 7))
    inplanes = 64
    stage_planes = [64, 128, 256, 512]
    stage_strides = [1, 2, 2, 2]                 # fst_l_stride=2 default
    stages = []
    for si in range(4):
        planes = stage_planes[si]
        blocks = []
        for bi in range(layers[si]):
            k = kernels[si + 1][bi]
            stride = stage_strides[si] if bi == 0 else 1
            width = planes                       # groups=1, base_width=64
            blk = {
                'k': k,
                'stride': (stride, stride, stride),
                'conv1': make_conv_bn(next(keys), width, inplanes, (k, 1, 1)),
                'conv2': make_conv_bn(next(keys), width, width, (1, 3, 3)),
                'conv3': make_conv_bn(next(keys), planes * EXPANSION, width, (1, 1, 1)),
            }
            if bi == 0 and (stride != 1 or inplanes != planes * EXPANSION):
                blk['ds'] = make_conv_bn(next(keys), planes * EXPANSION, inplanes,
                                         (1, 1, 1))
            blocks.append(blk)
            inplanes = planes * EXPANSION
        stages.append(blocks)
    params['stages'] = stages
    return params


# ----------------------------------------------------------------------------
# Forward pass (matches ResNet.forward semantics, returns (layer2, layer3, layer4))
# ----------------------------------------------------------------------------
def bottleneck_forward(x, blk):
    k = blk['k']
    identity = x
    out = conv3d_bn(x, blk['conv1'], stride=(1, 1, 1),
                    padding=(k // 2, 0, 0), relu=True)
    out = conv3d_bn(out, blk['conv2'], stride=blk['stride'],
                    padding=(0, 1, 1), relu=True)
    if 'ds' in blk:
        identity = conv3d_bn(x, blk['ds'], stride=blk['stride'],
                             padding=(0, 0, 0), relu=False)
    # conv3 + bn3 + residual add + final ReLU fused into the GEMM epilogue
    out = conv3d_bn(out, blk['conv3'], stride=(1, 1, 1), padding=(0, 0, 0),
                    relu=True, residual=identity)
    return out


def resnet_forward(params, x, kernels):
    # NCDHW (PyTorch interface) -> channels-last bf16 once; all layers run NDHWC.
    x = jnp.transpose(x, (0, 2, 3, 4, 1)).astype(jnp.bfloat16)
    k0 = kernels[0][0]
    x = conv3d_bn(x, params['conv1'], stride=(1, 2, 2),
                  padding=(k0 // 2, 3, 3), relu=True)
    if k0 == 7:
        x = maxpool3d(x, (3, 3, 3), (1, 2, 2), (1, 1, 1))
    else:
        x = maxpool3d(x, (1, 3, 4), (1, 2, 2), (0, 1, 1))
    outs = []
    for si, blocks in enumerate(params['stages']):
        for blk in blocks:
            x = bottleneck_forward(x, blk)
        if si >= 1:                              # outputs of layer2, layer3, layer4
            outs.append(jnp.transpose(x, (0, 4, 1, 2, 3)))   # back to NCDHW
    return tuple(outs)


if __name__ == "__main__":
    key = jax.random.PRNGKey(0)
    kp, kx = jax.random.split(key)

    layers = [1, 1, 1, 1]                        # one bottleneck per stage (small)
    kernels = [[1], [1], [3], [3], [3]]          # temporal kernels (conv1 + 4 stages)

    params = build_resnet_params(kp, layers, kernels)
    x = jax.random.normal(kx, (1, 3, 4, 32, 32), jnp.float32)   # NCDHW

    outs = jax.block_until_ready(resnet_forward(params, x, kernels))

    assert outs[0].shape == (1, 512, 2, 4, 4), outs[0].shape
    assert outs[1].shape == (1, 1024, 1, 2, 2), outs[1].shape
    assert outs[2].shape == (1, 2048, 1, 1, 1), outs[2].shape
    assert all(bool(jnp.all(jnp.isfinite(o.astype(jnp.float32)))) for o in outs)

    print("KERNEL_OK")
</pallas_src>

<mosaic_0001>
module attributes {stable_mosaic.version = 11 : i64} {
  func.func @_gemm_kernel(%arg0: i32, %arg1: i32, %arg2: i32, %arg3: memref<256x256xbf16, #tpu.memory_space<vmem>>, %arg4: memref<256x128xbf16, #tpu.memory_space<vmem>>, %arg5: memref<1x128xf32, #tpu.memory_space<vmem>>, %arg6: memref<256x128xbf16, #tpu.memory_space<vmem>>, %arg7: memref<256x128xf32, #tpu.memory_space<vmem>>) attributes {dimension_semantics = [#tpu.dimension_semantics<parallel>, #tpu.dimension_semantics<parallel>, #tpu.dimension_semantics<arbitrary>], iteration_bounds = array<i64: 4, 1, 1>, scalar_prefetch = 0 : i64, scratch_operands = 1 : i64, tpu.core_type = #tpu.core_type<tc>, window_params = [{transform_indices = @transform_0, window_bounds = array<i64: 256, 256>}, {transform_indices = @transform_1, window_bounds = array<i64: 256, 128>}, {transform_indices = @transform_2, window_bounds = array<i64: 1, 128>}, {transform_indices = @transform_3, window_bounds = array<i64: 256, 128>}]} {
    %c0_i32 = arith.constant 0 : i32
    %0 = arith.cmpi eq, %arg2, %c0_i32 : i32
    %1 = arith.extui %0 : i1 to i32
    %c0_i32_0 = arith.constant 0 : i32
    %2 = arith.cmpi ne, %1, %c0_i32_0 : i32
    scf.if %2 {
      %cst_10 = arith.constant 0.000000e+00 : f32
      %12 = vector.broadcast %cst_10 : f32 to vector<256x128xf32>
      %c0_11 = arith.constant 0 : index
      %c0_12 = arith.constant 0 : index
      %13 = vector.load %arg7[%c0_11, %c0_12] : memref<256x128xf32, #tpu.memory_space<vmem>>, vector<256x128xf32>
      tpu.vector_store %arg7[%c0_11, %c0_12], %12 {strides = array<i32>} : memref<256x128xf32, #tpu.memory_space<vmem>>, vector<256x128xf32>,
    } else {
    }
    %c0 = arith.constant 0 : index
    %c0_1 = arith.constant 0 : index
    %3 = vector.load %arg7[%c0, %c0_1] : memref<256x128xf32, #tpu.memory_space<vmem>>, vector<256x128xf32>
    %c0_2 = arith.constant 0 : index
    %c0_3 = arith.constant 0 : index
    %4 = vector.load %arg3[%c0_2, %c0_3] : memref<256x256xbf16, #tpu.memory_space<vmem>>, vector<256x256xbf16>
    %c0_4 = arith.constant 0 : index
    %c0_5 = arith.constant 0 : index
    %5 = vector.load %arg4[%c0_4, %c0_5] : memref<256x128xbf16, #tpu.memory_space<vmem>>, vector<256x128xbf16>
    %cst = arith.constant dense<0.000000e+00> : vector<256x128xf32>
    %6 = tpu.matmul %4, %5, %cst {dimension_numbers = #tpu.dot_dimension_numbers<[1], [0], [0], [1], [0, 0, 1, 1], [], []>} : vector<256x256xbf16>, vector<256x128xbf16>, vector<256x128xf32> -> vector<256x128xf32>
    %7 = arith.addf %3, %6 : vector<256x128xf32>
    %c0_6 = arith.constant 0 : index
    %c0_7 = arith.constant 0 : index
    %8 = vector.load %arg7[%c0_6, %c0_7] : memref<256x128xf32, #tpu.memory_space<vmem>>, vector<256x128xf32>
    tpu.vector_store %arg7[%c0_6, %c0_7], %7 {strides = array<i32>} : memref<256x128xf32, #tpu.memory_space<vmem>>, vector<256x128xf32>,
    %c0_i32_8 = arith.constant 0 : i32
    %9 = arith.cmpi eq, %arg2, %c0_i32_8 : i32
    %10 = arith.extui %9 : i1 to i32
    %c0_i32_9 = arith.constant 0 : i32
    %11 = arith.cmpi ne, %10, %c0_i32_9 : i32
    scf.if %11 {
      %c0_10 = arith.constant 0 : index
      %c0_11 = arith.constant 0 : index
      %12 = vector.load %arg7[%c0_10, %c0_11] : memref<256x128xf32, #tpu.memory_space<vmem>>, vector<256x128xf32>
      %c0_12 = arith.constant 0 : index
      %c0_13 = arith.constant 0 : index
      %13 = vector.load %arg5[%c0_12, %c0_13] : memref<1x128xf32, #tpu.memory_space<vmem>>, vector<1x128xf32>
      %14 = vector.broadcast %13 : vector<1x128xf32> to vector<256x128xf32>
      %15 = arith.addf %12, %14 : vector<256x128xf32>
      %cst_14 = arith.constant 0.000000e+00 : f32
      %16 = vector.broadcast %cst_14 : f32 to vector<256x128xf32>
      %17 = arith.maximumf %15, %16 : vector<256x128xf32>
      %18 = arith.truncf %17 : vector<256x128xf32> to vector<256x128xbf16>
      %c0_15 = arith.constant 0 : index
      %c0_16 = arith.constant 0 : index
      %19 = vector.load %arg6[%c0_15, %c0_16] : memref<256x128xbf16, #tpu.memory_space<vmem>>, vector<256x128xbf16>
      tpu.vector_store %arg6[%c0_15, %c0_16], %18 {strides = array<i32>} : memref<256x128xbf16, #tpu.memory_space<vmem>>, vector<256x128xbf16>,
    } else {
    }
    return
  }
  func.func @transform_0(%arg0: i32, %arg1: i32, %arg2: i32) -> (i32, i32) {
    %c0_i32 = arith.constant 0 : i32
    return %arg0, %arg2 : i32, i32
  }
  func.func @transform_1(%arg0: i32, %arg1: i32, %arg2: i32) -> (i32, i32) {
    %c0_i32 = arith.constant 0 : i32
    return %arg2, %arg1 : i32, i32
  }
  func.func @transform_2(%arg0: i32, %arg1: i32, %arg2: i32) -> (i32, i32) {
    %c0_i32 = arith.constant 0 : i32
    %c0_i32_0 = arith.constant 0 : i32
    return %c0_i32, %arg1 : i32, i32
  }
  func.func @transform_3(%arg0: i32, %arg1: i32, %arg2: i32) -> (i32, i32) {
    %c0_i32 = arith.constant 0 : i32
    return %arg0, %arg1 : i32, i32
  }
}

</mosaic_0001>

<llo_original>
// kernel: tpu_custom_call.1
$region0: #{tpu_custom_call.1}
  #allocation0 [shape = 'u32[]', space=smem, size = 0x4, offset = 0x4, fixed_abs, tag = 'smem constant byte address 0x4 - core index']
  #allocation1 [shape = 'u32[144,128]{1,0:T(1,128)}', space=vmem, size = 0x12000, scoped, tag = 'internal scratch']
  #allocation2 [shape = 'f32[256,128]{1,0:T(8,128)}', space=vmem, size = 0x20000, scoped, tag = 'scratch operand']
  %s0 = inlined_call_operand.hbm [shape: bf16[1024,256], index: 0, kind: input, shape index: {}]
  %s1 = inlined_call_operand.hbm [shape: bf16[256,128], index: 1, kind: input, shape index: {}]
  %s2 = inlined_call_operand.vmem [shape: f32[1,128], index: 2, kind: input, shape index: {}]
  %s3 = inlined_call_operand.hbm [shape: bf16[1024,128], index: 3, kind: output, shape index: {}]
  %s4 = sld [smem:[#allocation0]]
  $region61: #{tpu_custom_call.1} parent=0
    _
  %s6 = ssub.s32 1, %s4
  %s7 = scalar_select 0, %s6, %s4
  $region1: #{tpu_custom_call.1} parent=0
    #allocation3 [shape = 'u8[262144]{0}', space=vmem, size = 0x40000, scoped, tag = 'input window, operand 0']
    #allocation4 [shape = 's32[2]{0}', space=sflag, size = 0x8, scoped, tag = 'scoped memory for tpu_custom_call.1']
    #allocation5 [shape = 's32[2]{0}', space=sflag, size = 0x8, scoped, tag = 'scoped memory for tpu_custom_call.1']
    #allocation6 [shape = 'u8[65536]{0}', space=vmem, size = 0x10000, scoped, tag = 'input window, operand 1, single buffered']
    #allocation7 [shape = 's32[1]{0}', space=sflag, size = 0x4, scoped, tag = 'scoped memory for tpu_custom_call.1']
    #allocation8 [shape = 'u8[131072]{0}', space=vmem, size = 0x20000, scoped, tag = 'output window, operand 0']
    %8 = vsyncpa [#allocation4], 0
    %s9 = scalar_lea.sflag [#allocation4], 1
    %10 = vsyncpa %s9, 0
    %11 = vsyncpa [#allocation7], 0
    %12 = vsyncpa [#allocation5], 0
    %s13 = scalar_lea.sflag [#allocation5], 1
    %14 = vsyncpa %s13, 0
    loop: start=0, step=1, limit=6
    $region2: #{tpu_custom_call.1} parent=1 // loop_pre_header
      _
    $region3: #{tpu_custom_call.1} parent=1 // loop_header
      %s16 = sphi 0, %s20
      %p17 = scmp.ge.s32.totalorder %s16, 6
      %s23 = sphi 0, %s42
      %s24 = sphi 0, %s38
      %s25 = sphi 0, %s34
      %s26 = sphi 0, %s23
      %s27 = sphi 0, %s24
      %s28 = sphi 0, %s25
      %s29 = sphi 0, %s26
      %s30 = sphi 0, %s27
      %s31 = sphi 0, %s28
      %s47 = sphi 0, %s49
      %s50 = sphi 0, %s47
      %s51 = sphi 0, %s50
      %s67 = sphi 0, %s51
      %s75 = sphi 0, %s77
      %s78 = sphi 0, %s75
      %s79 = sphi 0, %s78
      %s95 = sphi 0, %s79
      %s101 = sphi 0, %s103
      %s104 = sphi 0, %s101
      %s105 = sphi 0, %s104
      %s121 = sphi 0, %s105
      %s129 = sphi 0, %s131
      %s132 = sphi 0, %s129
      %s133 = sphi 0, %s132
      %s149 = sphi 0, %s133
    $region4: #{tpu_custom_call.1} parent=1 // loop_header_branch
      %19 = sbr.rel (%p17) target = $region8
    $region5: #{tpu_custom_call.1} parent=1 // loop_body
      %s21 = ssub.s32 %s16, 1
      %s22 = ssub.s32 %s16, 2
      %s32 = sadd.s32 1, %s25
      %p33 = scmp.ge.s32.totalorder %s32, 1
      %s34 = scalar_select %p33, 0, %s32
      %s35 = sadd.s32 1, %s24
      %s36 = scalar_select %p33, %s35, %s24
      %p37 = scmp.ge.s32.totalorder %s36, 1
      %s38 = scalar_select %p37, 0, %s36
      %s39 = sadd.s32 1, %s23
      %s40 = scalar_select %p37, %s39, %s23
      %p41 = scmp.ge.s32.totalorder %s40, 4
      %s42 = scalar_select %p41, 0, %s40
      %s43 = ssub.s32 %s23, %s42
      %s44 = ssub.s32 %s25, %s34
      %s45 = sor.u32 %s43, %s44
      %p46 = scmp.eq.s32.totalorder %s45, 0
      %s48 = sadd.s32 %s47, 1
      %s49 = scalar_select %p46, %s47, %s48
      %p52 = pneg %p46
      %p53 = scmp.eq.s32.totalorder %s16, 3
      %p54 = por %p52, %p53
      %p55 = scmp.ne.s32.totalorder %s47, %s50
      %p56 = scmp.eq.s32.totalorder %s16, 0
      %p57 = por %p55, %p56
      %p58 = scmp.ne.s32.totalorder %s47, %s50
      %p59 = scmp.eq.s32.totalorder %s21, 3
      %p60 = por %p58, %p59
      %p61 = scmp.ne.s32.totalorder %s50, %s51
      %p62 = scmp.eq.s32.totalorder %s21, 0
      %p63 = por %p61, %p62
      %p64 = scmp.ne.s32.totalorder %s50, %s51
      %p65 = scmp.eq.s32.totalorder %s22, 3
      %p66 = por %p64, %p65
      %p68 = scmp.ne.s32.totalorder %s51, %s67
      %p69 = scmp.eq.s32.totalorder %s22, 0
      %p70 = por %p68, %p69
      %s71 = ssub.s32 %s25, %s34
      %s72 = ssub.s32 %s24, %s38
      %s73 = sor.u32 %s71, %s72
      %p74 = scmp.eq.s32.totalorder %s73, 0
      %s76 = sadd.s32 %s75, 1
      %s77 = scalar_select %p74, %s75, %s76
      %p80 = pneg %p74
      %p81 = scmp.eq.s32.totalorder %s16, 3
      %p82 = por %p80, %p81
      %p83 = scmp.ne.s32.totalorder %s75, %s78
      %p84 = scmp.eq.s32.totalorder %s16, 0
      %p85 = por %p83, %p84
      %p86 = scmp.ne.s32.totalorder %s75, %s78
      %p87 = scmp.eq.s32.totalorder %s21, 3
      %p88 = por %p86, %p87
      %p89 = scmp.ne.s32.totalorder %s78, %s79
      %p90 = scmp.eq.s32.totalorder %s21, 0
      %p91 = por %p89, %p90
      %p92 = scmp.ne.s32.totalorder %s78, %s79
      %p93 = scmp.eq.s32.totalorder %s22, 3
      %p94 = por %p92, %p93
      %p96 = scmp.ne.s32.totalorder %s79, %s95
      %p97 = scmp.eq.s32.totalorder %s22, 0
      %p98 = por %p96, %p97
      %s99 = ssub.s32 %s24, %s38
      %p100 = scmp.eq.s32.totalorder %s99, 0
      %s102 = sadd.s32 %s101, 1
      %s103 = scalar_select %p100, %s101, %s102
      %p106 = pneg %p100
      %p107 = scmp.eq.s32.totalorder %s16, 3
      %p108 = por %p106, %p107
      %p109 = scmp.ne.s32.totalorder %s101, %s104
      %p110 = scmp.eq.s32.totalorder %s16, 0
      %p111 = por %p109, %p110
      %p112 = scmp.ne.s32.totalorder %s101, %s104
      %p113 = scmp.eq.s32.totalorder %s21, 3
      %p114 = por %p112, %p113
      %p115 = scmp.ne.s32.totalorder %s104, %s105
      %p116 = scmp.eq.s32.totalorder %s21, 0
      %p117 = por %p115, %p116
      %p118 = scmp.ne.s32.totalorder %s104, %s105
      %p119 = scmp.eq.s32.totalorder %s22, 3
      %p120 = por %p118, %p119
      %p122 = scmp.ne.s32.totalorder %s105, %s121
      %p123 = scmp.eq.s32.totalorder %s22, 0
      %p124 = por %p122, %p123
      %s125 = ssub.s32 %s23, %s42
      %s126 = ssub.s32 %s24, %s38
      %s127 = sor.u32 %s125, %s126
      %p128 = scmp.eq.s32.totalorder %s127, 0
      %s130 = sadd.s32 %s129, 1
      %s131 = scalar_select %p128, %s129, %s130
      %p134 = pneg %p128
      %p135 = scmp.eq.s32.totalorder %s16, 3
      %p136 = por %p134, %p135
      %p137 = scmp.ne.s32.totalorder %s129, %s132
      %p138 = scmp.eq.s32.totalorder %s16, 0
      %p139 = por %p137, %p138
      %p140 = scmp.ne.s32.totalorder %s129, %s132
      %p141 = scmp.eq.s32.totalorder %s21, 3
      %p142 = por %p140, %p141
      %p143 = scmp.ne.s32.totalorder %s132, %s133
      %p144 = scmp.eq.s32.totalorder %s21, 0
      %p145 = por %p143, %p144
      %p146 = scmp.ne.s32.totalorder %s132, %s133
      %p147 = scmp.eq.s32.totalorder %s22, 3
      %p148 = por %p146, %p147
      %p150 = scmp.ne.s32.totalorder %s133, %s149
      %p151 = scmp.eq.s32.totalorder %s22, 0
      %p152 = por %p150, %p151
      %p153 = scmp.le.s32.totalorder 1, %s16
      %p154 = scmp.lt.s32.totalorder %s16, 5
      %p155 = pnand %p153, %p154
      %p156 = pneg %p155
      // Predicated region
      $region9: #{tpu_custom_call.1} parent=5 // pred_check
        _
      $region10: #{tpu_custom_call.1} parent=5 // pred_check_branch
        %158 = sbr.rel (%p155) target = $region12
      $region11: #{tpu_custom_call.1} parent=5 // pred_region
        %s159 = ssub.s32 %s16, 1
        // Predicated region
        $region13: #{tpu_custom_call.1} parent=11 // pred_check
          %p160 = pneg %p91
        $region14: #{tpu_custom_call.1} parent=11 // pred_check_branch
          %162 = sbr.rel (%p160) target = $region16
        $region15: #{tpu_custom_call.1} parent=11 // pred_region
          %s163 = smul.u32 32, %s28
          %s165 = ssub.s32 2048, 2048
          %166 = vsyncadd [#allocation7], %s165
          %s167 = sadd.s32 %s27, %s163
          %s168 = smul.addr %s167, 64
          %s169 = scalar_lea.hbm %s1, %s168
          %s170 = sshll.u32 [#allocation6], 4
          %s171 = int_to_ptr.vmem [resolvable:$true] %s170
          %176 = dma.hbm_to_vmem [thread:$0]  %s169, 2048, %s171, [#allocation7], 64, 64, 4
        $region16: #{tpu_custom_call.1} parent=11 // pred_fallthru
          _
        // Predicated region
        $region17: #{tpu_custom_call.1} parent=11 // pred_check
          %p177 = pneg %p117
        $region18: #{tpu_custom_call.1} parent=11 // pred_check_branch
          %179 = sbr.rel (%p177) target = $region20
        $region19: #{tpu_custom_call.1} parent=11 // pred_region
          %p180 = scmp.lt.s32.totalorder %s27, 0
          %s181 = scalar_select %p180, %s27, 0
          %s182 = scalar_lea.vmem %s2, %s181
        $region20: #{tpu_custom_call.1} parent=11 // pred_fallthru
          _
      $region12: #{tpu_custom_call.1} parent=5 // pred_fallthru
        _
      %p183 = scmp.lt.s32.totalorder %s16, 4
      // Predicated region
      $region21: #{tpu_custom_call.1} parent=5 // pred_check
        %p184 = pneg %p183
      $region22: #{tpu_custom_call.1} parent=5 // pred_check_branch
        %186 = sbr.rel (%p184) target = $region24
      $region23: #{tpu_custom_call.1} parent=5 // pred_region
        // Predicated region
        $region25: #{tpu_custom_call.1} parent=23 // pred_check
          %p187 = pneg %p57
        $region26: #{tpu_custom_call.1} parent=23 // pred_check_branch
          %189 = sbr.rel (%p187) target = $region28
        $region27: #{tpu_custom_call.1} parent=23 // pred_region
          %s190 = sand.u32 %s47, 1
          %s191 = scalar_lea.sflag [#allocation4], %s190
          %s192 = sand.u32 %s47, 1
          %s193 = smul.addr %s192, 256
          %s194 = scalar_lea.vmem [#allocation3], %s193
          %s195 = smul.u32 32, %s23
          %s196 = smul.u32 2, %s25
          %s198 = ssub.s32 4096, 4096
          %199 = vsyncadd %s191, %s198
          %s200 = smul.addr %s195, 2
          %s201 = sadd.s32 %s196, %s200
          %s202 = smul.addr %s201, 64
          %s203 = scalar_lea.hbm %s0, %s202
          %s204 = sshll.u32 %s194, 4
          %s205 = int_to_ptr.vmem [resolvable:$true] %s204
          %210 = dma.hbm_to_vmem [thread:$0]  %s203, 4096, %s205, %s191, 128, 128, 8
        $region28: #{tpu_custom_call.1} parent=23 // pred_fallthru
          _
      $region24: #{tpu_custom_call.1} parent=5 // pred_fallthru
        _
      %p211 = scmp.le.s32.totalorder 1, %s16
      %p212 = scmp.lt.s32.totalorder %s16, 5
      %p213 = pnand %p211, %p212
      %p214 = pneg %p213
      // Predicated region
      $region29: #{tpu_custom_call.1} parent=5 // pred_check
        _
      $region30: #{tpu_custom_call.1} parent=5 // pred_check_branch
        %216 = sbr.rel (%p213) target = $region32
      $region31: #{tpu_custom_call.1} parent=5 // pred_region
        %s217 = ssub.s32 %s16, 1
        %s218 = sand.u32 %s50, 1
        %s219 = scalar_lea.sflag [#allocation4], %s218
        %s220 = sand.u32 %s50, 1
        %s221 = smul.addr %s220, 256
        %s222 = scalar_lea.vmem [#allocation3], %s221
        // Predicated region
        $region33: #{tpu_custom_call.1} parent=31 // pred_check
          %p223 = pneg %p63
        $region34: #{tpu_custom_call.1} parent=31 // pred_check_branch
          %225 = sbr.rel (%p223) target = $region36
        $region35: #{tpu_custom_call.1} parent=31 // pred_region
          %226 = dma.done %s219, 4096
        $region36: #{tpu_custom_call.1} parent=31 // pred_fallthru
          _
        // Predicated region
        $region37: #{tpu_custom_call.1} parent=31 // pred_check
          %p227 = pneg %p91
        $region38: #{tpu_custom_call.1} parent=31 // pred_check_branch
          %229 = sbr.rel (%p227) target = $region40
        $region39: #{tpu_custom_call.1} parent=31 // pred_region
          %230 = dma.done [#allocation7], 2048
        $region40: #{tpu_custom_call.1} parent=31 // pred_fallthru
          _
        %s231 = sand.u32 %s50, 1
        %s232 = scalar_lea.sflag [#allocation4], %s231
        %s233 = sand.u32 %s50, 1
        %s234 = smul.addr %s233, 256
        %s235 = scalar_lea.vmem [#allocation3], %s234
        %p236 = pneg %p63
        %p237 = pneg %p60
        %p238 = pneg %p91
        %p239 = pneg %p88
        %p240 = scmp.lt.s32.totalorder %s27, 0
        %s241 = scalar_select %p240, %s27, 0
        %s242 = scalar_lea.vmem %s2, %s241
        %p243 = pneg %p117
        %p244 = pneg %p114
        %p245 = pneg %p145
        %p246 = pneg %p142
        %s247 = sand.u32 %s132, 1
        %s248 = scalar_lea.sflag [#allocation5], %s247
        %s249 = sand.u32 %s132, 1
        %s250 = smul.addr %s249, 128
        %s251 = scalar_lea.vmem [#allocation8], %s250
        %s252 = smul.u32 32, %s26
        %s253 = smul.u32 2, %s28
        %s254 = smul.u32 32, %s28
        %p255 = scmp.lt.s32.totalorder %s27, 0
        %s256 = scalar_select %p255, %s27, 0
        %s257 = scalar_lea.vmem %s2, %s256
        %s258 = smul.u32 32, %s26
        %p260 = scmp.eq.s32.totalorder %s28, 0
        // Predicated region
        $region41: #{tpu_custom_call.1} parent=31 // pred_check
          %p261 = pneg %p260
        $region42: #{tpu_custom_call.1} parent=31 // pred_check_branch
          %263 = sbr.rel (%p261) target = $region44
        $region43: #{tpu_custom_call.1} parent=31 // pred_region
          %264 = vst [vmem:[#allocation2] sm:$0xff] 0.0
          %265 = vst [vmem:[#allocation2 + $0x8] sm:$0xff] 0.0
          %266 = vst [vmem:[#allocation2 + $0x10] sm:$0xff] 0.0
          %267 = vst [vmem:[#allocation2 + $0x18] sm:$0xff] 0.0
          %268 = vst [vmem:[#allocation2 + $0x20] sm:$0xff] 0.0
          %269 = vst [vmem:[#allocation2 + $0x28] sm:$0xff] 0.0
          %270 = vst [vmem:[#allocation2 + $0x30] sm:$0xff] 0.0
          %271 = vst [vmem:[#allocation2 + $0x38] sm:$0xff] 0.0
          %272 = vst [vmem:[#allocation2 + $0x40] sm:$0xff] 0.0
          %273 = vst [vmem:[#allocation2 + $0x48] sm:$0xff] 0.0
          %274 = vst [vmem:[#allocation2 + $0x50] sm:$0xff] 0.0
          %275 = vst [vmem:[#allocation2 + $0x58] sm:$0xff] 0.0
          %276 = vst [vmem:[#allocation2 + $0x60] sm:$0xff] 0.0
          %277 = vst [vmem:[#allocation2 + $0x68] sm:$0xff] 0.0
          %278 = vst [vmem:[#allocation2 + $0x70] sm:$0xff] 0.0
          %279 = vst [vmem:[#allocation2 + $0x78] sm:$0xff] 0.0
          %280 = vst [vmem:[#allocation2 + $0x80] sm:$0xff] 0.0
          %281 = vst [vmem:[#allocation2 + $0x88] sm:$0xff] 0.0
          %282 = vst [vmem:[#allocation2 + $0x90] sm:$0xff] 0.0
          %283 = vst [vmem:[#allocation2 + $0x98] sm:$0xff] 0.0
          %284 = vst [vmem:[#allocation2 + $0xa0] sm:$0xff] 0.0
          %285 = vst [vmem:[#allocation2 + $0xa8] sm:$0xff] 0.0
          %286 = vst [vmem:[#allocation2 + $0xb0] sm:$0xff] 0.0
          %287 = vst [vmem:[#allocation2 + $0xb8] sm:$0xff] 0.0
          %288 = vst [vmem:[#allocation2 + $0xc0] sm:$0xff] 0.0
          %289 = vst [vmem:[#allocation2 + $0xc8] sm:$0xff] 0.0
          %290 = vst [vmem:[#allocation2 + $0xd0] sm:$0xff] 0.0
          %291 = vst [vmem:[#allocation2 + $0xd8] sm:$0xff] 0.0
          %292 = vst [vmem:[#allocation2 + $0xe0] sm:$0xff] 0.0
          %293 = vst [vmem:[#allocation2 + $0xe8] sm:$0xff] 0.0
          %294 = vst [vmem:[#allocation2 + $0xf0] sm:$0xff] 0.0
          %295 = vst [vmem:[#allocation2 + $0xf8] sm:$0xff] 0.0
        $region44: #{tpu_custom_call.1} parent=31 // pred_fallthru
          _
        %v296 = vld [vmem:[#allocation2] sm:$0xff]
        %v297 = vld [vmem:[#allocation2 + $0x8] sm:$0xff]
        %v298 = vld [vmem:[#allocation2 + $0x10] sm:$0xff]
        %v299 = vld [vmem:[#allocation2 + $0x18] sm:$0xff]
        %v300 = vld [vmem:[#allocation2 + $0x20] sm:$0xff]
        %v301 = vld [vmem:[#allocation2 + $0x28] sm:$0xff]
        %v302 = vld [vmem:[#allocation2 + $0x30] sm:$0xff]
        %v303 = vld [vmem:[#allocation2 + $0x38] sm:$0xff]
        %v304 = vld [vmem:[#allocation2 + $0x40] sm:$0xff]
        %v305 = vld [vmem:[#allocation2 + $0x48] sm:$0xff]
        %v306 = vld [vmem:[#allocation2 + $0x50] sm:$0xff]
        %v307 = vld [vmem:[#allocation2 + $0x58] sm:$0xff]
        %v308 = vld [vmem:[#allocation2 + $0x60] sm:$0xff]
        %v309 = vld [vmem:[#allocation2 + $0x68] sm:$0xff]
        %v310 = vld [vmem:[#allocation2 + $0x70] sm:$0xff]
        %v311 = vld [vmem:[#allocation2 + $0x78] sm:$0xff]
        %v312 = vld [vmem:[#allocation2 + $0x80] sm:$0xff]
        %v313 = vld [vmem:[#allocation2 + $0x88] sm:$0xff]
        %v314 = vld [vmem:[#allocation2 + $0x90] sm:$0xff]
        %v315 = vld [vmem:[#allocation2 + $0x98] sm:$0xff]
        %v316 = vld [vmem:[#allocation2 + $0xa0] sm:$0xff]
        %v317 = vld [vmem:[#allocation2 + $0xa8] sm:$0xff]
        %v318 = vld [vmem:[#allocation2 + $0xb0] sm:$0xff]
        %v319 = vld [vmem:[#allocation2 + $0xb8] sm:$0xff]
        %v320 = vld [vmem:[#allocation2 + $0xc0] sm:$0xff]
        %v321 = vld [vmem:[#allocation2 + $0xc8] sm:$0xff]
        %v322 = vld [vmem:[#allocation2 + $0xd0] sm:$0xff]
        %v323 = vld [vmem:[#allocation2 + $0xd8] sm:$0xff]
        %v324 = vld [vmem:[#allocation2 + $0xe0] sm:$0xff]
        %v325 = vld [vmem:[#allocation2 + $0xe8] sm:$0xff]
        %v326 = vld [vmem:[#allocation2 + $0xf0] sm:$0xff]
        %v327 = vld [vmem:[#allocation2 + $0xf8] sm:$0xff]
        %v328 = vld [vmem:[%s222] sm:$0xff]
        %v329 = vld [vmem:[%s222 + $0x8] sm:$0xff]
        %v330 = vld [vmem:[%s222 + $0x10] sm:$0xff]
        %v331 = vld [vmem:[%s222 + $0x18] sm:$0xff]
        %v332 = vld [vmem:[%s222 + $0x20] sm:$0xff]
        %v333 = vld [vmem:[%s222 + $0x28] sm:$0xff]
        %v334 = vld [vmem:[%s222 + $0x30] sm:$0xff]
        %v335 = vld [vmem:[%s222 + $0x38] sm:$0xff]
        %v336 = vld [vmem:[%s222 + $0x40] sm:$0xff]
        %v337 = vld [vmem:[%s222 + $0x48] sm:$0xff]
        %v338 = vld [vmem:[%s222 + $0x50] sm:$0xff]
        %v339 = vld [vmem:[%s222 + $0x58] sm:$0xff]
        %v340 = vld [vmem:[%s222 + $0x60] sm:$0xff]
        %v341 = vld [vmem:[%s222 + $0x68] sm:$0xff]
        %v342 = vld [vmem:[%s222 + $0x70] sm:$0xff]
        %v343 = vld [vmem:[%s222 + $0x78] sm:$0xff]
        %v344 = vld [vmem:[%s222 + $0x80] sm:$0xff]
        %v345 = vld [vmem:[%s222 + $0x88] sm:$0xff]
        %v346 = vld [vmem:[%s222 + $0x90] sm:$0xff]
        %v347 = vld [vmem:[%s222 + $0x98] sm:$0xff]
        %v348 = vld [vmem:[%s222 + $0xa0] sm:$0xff]
        %v349 = vld [vmem:[%s222 + $0xa8] sm:$0xff]
        %v350 = vld [vmem:[%s222 + $0xb0] sm:$0xff]
        %v351 = vld [vmem:[%s222 + $0xb8] sm:$0xff]
        %v352 = vld [vmem:[%s222 + $0xc0] sm:$0xff]
        %v353 = vld [vmem:[%s222 + $0xc8] sm:$0xff]
        %v354 = vld [vmem:[%s222 + $0xd0] sm:$0xff]
        %v355 = vld [vmem:[%s222 + $0xd8] sm:$0xff]
        %v356 = vld [vmem:[%s222 + $0xe0] sm:$0xff]
        %v357 = vld [vmem:[%s222 + $0xe8] sm:$0xff]
        %v358 = vld [vmem:[%s222 + $0xf0] sm:$0xff]
        %v359 = vld [vmem:[%s222 + $0xf8] sm:$0xff]
        %v360 = vld [vmem:[#allocation6] sm:$0xf]
        %v361 = vld [vmem:[#allocation6 + $0x4] sm:$0xf]
        %v362 = vld [vmem:[#allocation6 + $0x8] sm:$0xf]
        %v363 = vld [vmem:[#allocation6 + $0xc] sm:$0xf]
        %v364 = vld [vmem:[#allocation6 + $0x10] sm:$0xf]
        %v365 = vld [vmem:[#allocation6 + $0x14] sm:$0xf]
        %v366 = vld [vmem:[#allocation6 + $0x18] sm:$0xf]
        %v367 = vld [vmem:[#allocation6 + $0x1c] sm:$0xf]
        %v368 = vld [vmem:[#allocation6 + $0x20] sm:$0xf]
        %v369 = vld [vmem:[#allocation6 + $0x24] sm:$0xf]
        %v370 = vld [vmem:[#allocation6 + $0x28] sm:$0xf]
        %v371 = vld [vmem:[#allocation6 + $0x2c] sm:$0xf]
        %v372 = vld [vmem:[#allocation6 + $0x30] sm:$0xf]
        %v373 = vld [vmem:[#allocation6 + $0x34] sm:$0xf]
        %v374 = vld [vmem:[#allocation6 + $0x38] sm:$0xf]
        %v375 = vld [vmem:[#allocation6 + $0x3c] sm:$0xf]
        %v376 = vld [vmem:[#allocation6 + $0x40] sm:$0xf]
        %v377 = vld [vmem:[#allocation6 + $0x44] sm:$0xf]
        %v378 = vld [vmem:[#allocation6 + $0x48] sm:$0xf]
        %v379 = vld [vmem:[#allocation6 + $0x4c] sm:$0xf]
        %v380 = vld [vmem:[#allocation6 + $0x50] sm:$0xf]
        %v381 = vld [vmem:[#allocation6 + $0x54] sm:$0xf]
        %v382 = vld [vmem:[#allocation6 + $0x58] sm:$0xf]
        %v383 = vld [vmem:[#allocation6 + $0x5c] sm:$0xf]
        %v384 = vld [vmem:[#allocation6 + $0x60] sm:$0xf]
        %v385 = vld [vmem:[#allocation6 + $0x64] sm:$0xf]
        %v386 = vld [vmem:[#allocation6 + $0x68] sm:$0xf]
        %v387 = vld [vmem:[#allocation6 + $0x6c] sm:$0xf]
        %v388 = vld [vmem:[#allocation6 + $0x70] sm:$0xf]
        %v389 = vld [vmem:[#allocation6 + $0x74] sm:$0xf]
        %v390 = vld [vmem:[#allocation6 + $0x78] sm:$0xf]
        %v391 = vld [vmem:[#allocation6 + $0x7c] sm:$0xf]
        %v424 = vunpack.c.l.b16 %v328
        %v425 = vunpack.c.h.b16 %v328
        %v426 = vunpack.c.l.b16 %v329
        %v427 = vunpack.c.h.b16 %v329
        %v428 = vunpack.c.l.b16 %v330
        %v429 = vunpack.c.h.b16 %v330
        %v430 = vunpack.c.l.b16 %v331
        %v431 = vunpack.c.h.b16 %v331
        %v432 = vunpack.c.l.b16 %v332
        %v433 = vunpack.c.h.b16 %v332
        %v434 = vunpack.c.l.b16 %v333
        %v435 = vunpack.c.h.b16 %v333
        %v436 = vunpack.c.l.b16 %v334
        %v437 = vunpack.c.h.b16 %v334
        %v438 = vunpack.c.l.b16 %v335
        %v439 = vunpack.c.h.b16 %v335
        %v440 = vunpack.c.l.b16 %v336
        %v441 = vunpack.c.h.b16 %v336
        %v442 = vunpack.c.l.b16 %v337
        %v443 = vunpack.c.h.b16 %v337
        %v444 = vunpack.c.l.b16 %v338
        %v445 = vunpack.c.h.b16 %v338
        %v446 = vunpack.c.l.b16 %v339
        %v447 = vunpack.c.h.b16 %v339
        %v448 = vunpack.c.l.b16 %v340
        %v449 = vunpack.c.h.b16 %v340
        %v450 = vunpack.c.l.b16 %v341
        %v451 = vunpack.c.h.b16 %v341
        %v452 = vunpack.c.l.b16 %v342
        %v453 = vunpack.c.h.b16 %v342
        %v454 = vunpack.c.l.b16 %v343
        %v455 = vunpack.c.h.b16 %v343
        %v456 = vunpack.c.l.b16 %v344
        %v457 = vunpack.c.h.b16 %v344
        %v458 = vunpack.c.l.b16 %v345
        %v459 = vunpack.c.h.b16 %v345
        %v460 = vunpack.c.l.b16 %v346
        %v461 = vunpack.c.h.b16 %v346
        %v462 = vunpack.c.l.b16 %v347
        %v463 = vunpack.c.h.b16 %v347
        %v464 = vunpack.c.l.b16 %v348
        %v465 = vunpack.c.h.b16 %v348
        %v466 = vunpack.c.l.b16 %v349
        %v467 = vunpack.c.h.b16 %v349
        %v468 = vunpack.c.l.b16 %v350
        %v469 = vunpack.c.h.b16 %v350
        %v470 = vunpack.c.l.b16 %v351
        %v471 = vunpack.c.h.b16 %v351
        %v472 = vunpack.c.l.b16 %v352
        %v473 = vunpack.c.h.b16 %v352
        %v474 = vunpack.c.l.b16 %v353
        %v475 = vunpack.c.h.b16 %v353
        %v476 = vunpack.c.l.b16 %v354
        %v477 = vunpack.c.h.b16 %v354
        %v478 = vunpack.c.l.b16 %v355
        %v479 = vunpack.c.h.b16 %v355
        %v480 = vunpack.c.l.b16 %v356
        %v481 = vunpack.c.h.b16 %v356
        %v482 = vunpack.c.l.b16 %v357
        %v483 = vunpack.c.h.b16 %v357
        %v484 = vunpack.c.l.b16 %v358
        %v485 = vunpack.c.h.b16 %v358
        %v486 = vunpack.c.l.b16 %v359
        %v487 = vunpack.c.h.b16 %v359
        %v488 = vpack.c.b16 %v426, %v424
        %v489 = vpack.c.b16 %v427, %v425
        %v490 = vpack.c.b16 %v430, %v428
        %v491 = vpack.c.b16 %v431, %v429
        %v492 = vpack.c.b16 %v434, %v432
        %v493 = vpack.c.b16 %v435, %v433
        %v494 = vpack.c.b16 %v438, %v436
        %v495 = vpack.c.b16 %v439, %v437
        %v496 = vpack.c.b16 %v442, %v440
        %v497 = vpack.c.b16 %v443, %v441
        %v498 = vpack.c.b16 %v446, %v444
        %v499 = vpack.c.b16 %v447, %v445
        %v500 = vpack.c.b16 %v450, %v448
        %v501 = vpack.c.b16 %v451, %v449
        %v502 = vpack.c.b16 %v454, %v452
        %v503 = vpack.c.b16 %v455, %v453
        %v504 = vpack.c.b16 %v458, %v456
        %v505 = vpack.c.b16 %v459, %v457
        %v506 = vpack.c.b16 %v462, %v460
        %v507 = vpack.c.b16 %v463, %v461
        %v508 = vpack.c.b16 %v466, %v464
        %v509 = vpack.c.b16 %v467, %v465
        %v510 = vpack.c.b16 %v470, %v468
        %v511 = vpack.c.b16 %v471, %v469
        %v512 = vpack.c.b16 %v474, %v472
        %v513 = vpack.c.b16 %v475, %v473
        %v514 = vpack.c.b16 %v478, %v476
        %v515 = vpack.c.b16 %v479, %v477
        %v516 = vpack.c.b16 %v482, %v480
        %v517 = vpack.c.b16 %v483, %v481
        %v518 = vpack.c.b16 %v486, %v484
        %v519 = vpack.c.b16 %v487, %v485
        %v584 = vunpack.c.l.b16 %v360
        %v585 = vunpack.c.l.b16 %v361
        %v586 = vunpack.c.l.b16 %v362
        %v587 = vunpack.c.l.b16 %v363
        %v588 = vunpack.c.l.b16 %v364
        %v589 = vunpack.c.l.b16 %v365
        %v590 = vunpack.c.l.b16 %v366
        %v591 = vunpack.c.l.b16 %v367
        %v592 = vunpack.c.l.b16 %v368
        %v593 = vunpack.c.l.b16 %v369
        %v594 = vunpack.c.l.b16 %v370
        %v595 = vunpack.c.l.b16 %v371
        %v596 = vunpack.c.l.b16 %v372
        %v597 = vunpack.c.l.b16 %v373
        %v598 = vunpack.c.l.b16 %v374
        %v599 = vunpack.c.l.b16 %v375
        %v600 = vunpack.c.l.b16 %v376
        %v601 = vunpack.c.l.b16 %v377
        %v602 = vunpack.c.l.b16 %v378
        %v603 = vunpack.c.l.b16 %v379
        %v604 = vunpack.c.l.b16 %v380
        %v605 = vunpack.c.l.b16 %v381
        %v606 = vunpack.c.l.b16 %v382
        %v607 = vunpack.c.l.b16 %v383
        %v608 = vunpack.c.l.b16 %v384
        %v609 = vunpack.c.l.b16 %v385
        %v610 = vunpack.c.l.b16 %v386
        %v611 = vunpack.c.l.b16 %v387
        %v612 = vunpack.c.l.b16 %v388
        %v613 = vunpack.c.l.b16 %v389
        %v614 = vunpack.c.l.b16 %v390
        %v615 = vunpack.c.l.b16 %v391
        %v616 = vpack.c.b16 %v585, %v584
        %v617 = vpack.c.b16 %v587, %v586
        %v618 = vpack.c.b16 %v589, %v588
        %v619 = vpack.c.b16 %v591, %v590
        %v620 = vpack.c.b16 %v593, %v592
        %v621 = vpack.c.b16 %v595, %v594
        %v622 = vpack.c.b16 %v597, %v596
        %v623 = vpack.c.b16 %v599, %v598
        %v624 = vpack.c.b16 %v601, %v600
        %v625 = vpack.c.b16 %v603, %v602
        %v626 = vpack.c.b16 %v605, %v604
        %v627 = vpack.c.b16 %v607, %v606
        %v628 = vpack.c.b16 %v609, %v608
        %v629 = vpack.c.b16 %v611, %v610
        %v630 = vpack.c.b16 %v613, %v612
        %v631 = vpack.c.b16 %v615, %v614
        %648 = vmatprep.subr.bf16.mxu0 0
        %649 = vmatpush1.bf16.msra.mxu0 %v616
        %650 = vmatprep.subr.bf16.mxu0 0
        %651 = vmatpush1.bf16.msra.mxu0 %v617
        %652 = vmatprep.subr.bf16.mxu0 0
        %653 = vmatpush1.bf16.msra.mxu0 %v618
        %654 = vmatprep.subr.bf16.mxu0 0
        %655 = vmatpush1.bf16.msra.mxu0 %v619
        %656 = vmatprep.subr.bf16.mxu0 0
        %657 = vmatpush1.bf16.msra.mxu0 %v620
        %658 = vmatprep.subr.bf16.mxu0 0
        %659 = vmatpush1.bf16.msra.mxu0 %v621
        %660 = vmatprep.subr.bf16.mxu0 0
        %661 = vmatpush1.bf16.msra.mxu0 %v622
        %662 = vmatprep.subr.bf16.mxu0 0
        %663 = vmatpush1.bf16.msra.mxu0 %v623
        %664 = vmatprep.subr.bf16.mxu0 0
        %665 = vmatpush1.bf16.msra.mxu0 %v624
        %666 = vmatprep.subr.bf16.mxu0 0
        %667 = vmatpush1.bf16.msra.mxu0 %v625
        %668 = vmatprep.subr.bf16.mxu0 0
        %669 = vmatpush1.bf16.msra.mxu0 %v626
        %670 = vmatprep.subr.bf16.mxu0 0
        %671 = vmatpush1.bf16.msra.mxu0 %v627
        %672 = vmatprep.subr.bf16.mxu0 0
        %673 = vmatpush1.bf16.msra.mxu0 %v628
        %674 = vmatprep.subr.bf16.mxu0 0
        %675 = vmatpush1.bf16.msra.mxu0 %v629
        %676 = vmatprep.subr.bf16.mxu0 0
        %677 = vmatpush1.bf16.msra.mxu0 %v630
        %678 = vmatprep.subr.bf16.mxu0 0
        %679 = vmatpush1.bf16.msra.mxu0 %v631
        %680 = vmatprep.mubr.bf16.mxu0 %v489
        %681 = vmatmul.mubr.bf16.gmra.mrb[0].mxu0 %v488
        %v682 = vpop.f32.mrb[0].mxu0
        %v683 = vadd.f32 0.0, %v682
        %v684 = vpop.f32.mrb[0].mxu0
        %v685 = vpop.f32.mrb[0].mxu0
        %v686 = vadd.f32 0.0, %v685
        %v687 = vpop.f32.mrb[0].mxu0
        %688 = vmatprep.mubr.bf16.mxu0 %v491
        %689 = vmatmul.mubr.bf16.gmra.mrb[0].mxu0 %v490
        %v690 = vpop.f32.mrb[0].mxu0
        %v691 = vadd.f32 0.0, %v690
        %v692 = vpop.f32.mrb[0].mxu0
        %v693 = vpop.f32.mrb[0].mxu0
        %v694 = vadd.f32 0.0, %v693
        %v695 = vpop.f32.mrb[0].mxu0
        %696 = vmatprep.mubr.bf16.mxu0 %v493
        %697 = vmatmul.mubr.bf16.gmra.mrb[0].mxu0 %v492
        %v698 = vpop.f32.mrb[0].mxu0
        %v699 = vadd.f32 0.0, %v698
        %v700 = vpop.f32.mrb[0].mxu0
        %v701 = vpop.f32.mrb[0].mxu0
        %v702 = vadd.f32 0.0, %v701
        %v703 = vpop.f32.mrb[0].mxu0
        %704 = vmatprep.mubr.bf16.mxu0 %v495
        %705 = vmatmul.mubr.bf16.gmra.mrb[0].mxu0 %v494
        %v706 = vpop.f32.mrb[0].mxu0
        %v707 = vadd.f32 0.0, %v706
        %v708 = vpop.f32.mrb[0].mxu0
        %v709 = vpop.f32.mrb[0].mxu0
        %v710 = vadd.f32 0.0, %v709
        %v711 = vpop.f32.mrb[0].mxu0
        %712 = vmatprep.mubr.bf16.mxu0 %v497
        %713 = vmatmul.mubr.bf16.gmra.mrb[0].mxu0 %v496
        %v714 = vpop.f32.mrb[0].mxu0
        %v715 = vadd.f32 0.0, %v714
        %v716 = vpop.f32.mrb[0].mxu0
        %v717 = vpop.f32.mrb[0].mxu0
        %v718 = vadd.f32 0.0, %v717
        %v719 = vpop.f32.mrb[0].mxu0
        %720 = vmatprep.mubr.bf16.mxu0 %v499
        %721 = vmatmul.mubr.bf16.gmra.mrb[0].mxu0 %v498
        %v722 = vpop.f32.mrb[0].mxu0
        %v723 = vadd.f32 0.0, %v722
        %v724 = vpop.f32.mrb[0].mxu0
        %v725 = vpop.f32.mrb[0].mxu0
        %v726 = vadd.f32 0.0, %v725
        %v727 = vpop.f32.mrb[0].mxu0
        %728 = vmatprep.mubr.bf16.mxu0 %v501
        %729 = vmatmul.mubr.bf16.gmra.mrb[0].mxu0 %v500
        %v730 = vpop.f32.mrb[0].mxu0
        %v731 = vadd.f32 0.0, %v730
        %v732 = vpop.f32.mrb[0].mxu0
        %v733 = vpop.f32.mrb[0].mxu0
        %v734 = vadd.f32 0.0, %v733
        %v735 = vpop.f32.mrb[0].mxu0
        %736 = vmatprep.mubr.bf16.mxu0 %v503
        %737 = vmatmul.mubr.bf16.gmra.mrb[0].mxu0 %v502
        %v738 = vpop.f32.mrb[0].mxu0
        %v739 = vadd.f32 0.0, %v738
        %v740 = vpop.f32.mrb[0].mxu0
        %v741 = vpop.f32.mrb[0].mxu0
        %v742 = vadd.f32 0.0, %v741
        %v743 = vpop.f32.mrb[0].mxu0
        %744 = vmatprep.mubr.bf16.mxu0 %v505
        %745 = vmatmul.mubr.bf16.gmra.mrb[0].mxu0 %v504
        %v746 = vpop.f32.mrb[0].mxu0
        %v747 = vadd.f32 0.0, %v746
        %v748 = vpop.f32.mrb[0].mxu0
        %v749 = vpop.f32.mrb[0].mxu0
        %v750 = vadd.f32 0.0, %v749
        %v751 = vpop.f32.mrb[0].mxu0
        %752 = vmatprep.mubr.bf16.mxu0 %v507
        %753 = vmatmul.mubr.bf16.gmra.mrb[0].mxu0 %v506
        %v754 = vpop.f32.mrb[0].mxu0
        %v755 = vadd.f32 0.0, %v754
        %v756 = vpop.f32.mrb[0].mxu0
        %v757 = vpop.f32.mrb[0].mxu0
        %v758 = vadd.f32 0.0, %v757
        %v759 = vpop.f32.mrb[0].mxu0
        %760 = vmatprep.mubr.bf16.mxu0 %v509
        %761 = vmatmul.mubr.bf16.gmra.mrb[0].mxu0 %v508
        %v762 = vpop.f32.mrb[0].mxu0
        %v763 = vadd.f32 0.0, %v762
        %v764 = vpop.f32.mrb[0].mxu0
        %v765 = vpop.f32.mrb[0].mxu0
        %v766 = vadd.f32 0.0, %v765
        %v767 = vpop.f32.mrb[0].mxu0
        %768 = vmatprep.mubr.bf16.mxu0 %v511
        %769 = vmatmul.mubr.bf16.gmra.mrb[0].mxu0 %v510
        %v770 = vpop.f32.mrb[0].mxu0
        %v771 = vadd.f32 0.0, %v770
        %v772 = vpop.f32.mrb[0].mxu0
        %v773 = vpop.f32.mrb[0].mxu0
        %v774 = vadd.f32 0.0, %v773
        %v775 = vpop.f32.mrb[0].mxu0
        %776 = vmatprep.mubr.bf16.mxu0 %v513
        %777 = vmatmul.mubr.bf16.gmra.mrb[0].mxu0 %v512
        %v778 = vpop.f32.mrb[0].mxu0
        %v779 = vadd.f32 0.0, %v778
        %v780 = vpop.f32.mrb[0].mxu0
        %v781 = vpop.f32.mrb[0].mxu0
        %v782 = vadd.f32 0.0, %v781
        %v783 = vpop.f32.mrb[0].mxu0
        %784 = vmatprep.mubr.bf16.mxu0 %v515
        %785 = vmatmul.mubr.bf16.gmra.mrb[0].mxu0 %v514
        %v786 = vpop.f32.mrb[0].mxu0
        %v787 = vadd.f32 0.0, %v786
        %v788 = vpop.f32.mrb[0].mxu0
        %v789 = vpop.f32.mrb[0].mxu0
        %v790 = vadd.f32 0.0, %v789
        %v791 = vpop.f32.mrb[0].mxu0
        %792 = vmatprep.mubr.bf16.mxu0 %v517
        %793 = vmatmul.mubr.bf16.gmra.mrb[0].mxu0 %v516
        %v794 = vpop.f32.mrb[0].mxu0
        %v795 = vadd.f32 0.0, %v794
        %v796 = vpop.f32.mrb[0].mxu0
        %v797 = vpop.f32.mrb[0].mxu0
        %v798 = vadd.f32 0.0, %v797
        %v799 = vpop.f32.mrb[0].mxu0
        %800 = vmatprep.mubr.bf16.mxu0 %v519
        %801 = vmatmul.mubr.bf16.gmra.mrb[0].mxu0 %v518
        %v802 = vpop.f32.mrb[0].mxu0
        %v803 = vadd.f32 0.0, %v802
        %v804 = vpop.f32.mrb[0].mxu0
        %v805 = vpop.f32.mrb[0].mxu0
        %v806 = vadd.f32 0.0, %v805
        %v807 = vpop.f32.mrb[0].mxu0
        %808 = vdwg.mxu0
        %v809 = vadd.f32 %v296, %v683
        %v810 = vadd.f32 %v297, %v686
        %v811 = vadd.f32 %v298, %v691
        %v812 = vadd.f32 %v299, %v694
        %v813 = vadd.f32 %v300, %v699
        %v814 = vadd.f32 %v301, %v702
        %v815 = vadd.f32 %v302, %v707
        %v816 = vadd.f32 %v303, %v710
        %v817 = vadd.f32 %v304, %v715
        %v818 = vadd.f32 %v305, %v718
        %v819 = vadd.f32 %v306, %v723
        %v820 = vadd.f32 %v307, %v726
        %v821 = vadd.f32 %v308, %v731
        %v822 = vadd.f32 %v309, %v734
        %v823 = vadd.f32 %v310, %v739
        %v824 = vadd.f32 %v311, %v742
        %v825 = vadd.f32 %v312, %v747
        %v826 = vadd.f32 %v313, %v750
        %v827 = vadd.f32 %v314, %v755
        %v828 = vadd.f32 %v315, %v758
        %v829 = vadd.f32 %v316, %v763
        %v830 = vadd.f32 %v317, %v766
        %v831 = vadd.f32 %v318, %v771
        %v832 = vadd.f32 %v319, %v774
        %v833 = vadd.f32 %v320, %v779
        %v834 = vadd.f32 %v321, %v782
        %v835 = vadd.f32 %v322, %v787
        %v836 = vadd.f32 %v323, %v790
        %v837 = vadd.f32 %v324, %v795
        %v838 = vadd.f32 %v325, %v798
        %v839 = vadd.f32 %v326, %v803
        %v840 = vadd.f32 %v327, %v806
        %841 = vst [vmem:[#allocation2] sm:$0xff] %v809
        %842 = vst [vmem:[#allocation2 + $0x8] sm:$0xff] %v810
        %843 = vst [vmem:[#allocation2 + $0x10] sm:$0xff] %v811
        %844 = vst [vmem:[#allocation2 + $0x18] sm:$0xff] %v812
        %845 = vst [vmem:[#allocation2 + $0x20] sm:$0xff] %v813
        %846 = vst [vmem:[#allocation2 + $0x28] sm:$0xff] %v814
        %847 = vst [vmem:[#allocation2 + $0x30] sm:$0xff] %v815
        %848 = vst [vmem:[#allocation2 + $0x38] sm:$0xff] %v816
        %849 = vst [vmem:[#allocation2 + $0x40] sm:$0xff] %v817
        %850 = vst [vmem:[#allocation2 + $0x48] sm:$0xff] %v818
        %851 = vst [vmem:[#allocation2 + $0x50] sm:$0xff] %v819
        %852 = vst [vmem:[#allocation2 + $0x58] sm:$0xff] %v820
        %853 = vst [vmem:[#allocation2 + $0x60] sm:$0xff] %v821
        %854 = vst [vmem:[#allocation2 + $0x68] sm:$0xff] %v822
        %855 = vst [vmem:[#allocation2 + $0x70] sm:$0xff] %v823
        %856 = vst [vmem:[#allocation2 + $0x78] sm:$0xff] %v824
        %857 = vst [vmem:[#allocation2 + $0x80] sm:$0xff] %v825
        %858 = vst [vmem:[#allocation2 + $0x88] sm:$0xff] %v826
        %859 = vst [vmem:[#allocation2 + $0x90] sm:$0xff] %v827
        %860 = vst [vmem:[#allocation2 + $0x98] sm:$0xff] %v828
        %861 = vst [vmem:[#allocation2 + $0xa0] sm:$0xff] %v829
        %862 = vst [vmem:[#allocation2 + $0xa8] sm:$0xff] %v830
        %863 = vst [vmem:[#allocation2 + $0xb0] sm:$0xff] %v831
        %864 = vst [vmem:[#allocation2 + $0xb8] sm:$0xff] %v832
        %865 = vst [vmem:[#allocation2 + $0xc0] sm:$0xff] %v833
        %866 = vst [vmem:[#allocation2 + $0xc8] sm:$0xff] %v834
        %867 = vst [vmem:[#allocation2 + $0xd0] sm:$0xff] %v835
        %868 = vst [vmem:[#allocation2 + $0xd8] sm:$0xff] %v836
        %869 = vst [vmem:[#allocation2 + $0xe0] sm:$0xff] %v837
        %870 = vst [vmem:[#allocation2 + $0xe8] sm:$0xff] %v838
        %871 = vst [vmem:[#allocation2 + $0xf0] sm:$0xff] %v839
        %872 = vst [vmem:[#allocation2 + $0xf8] sm:$0xff] %v840
        // Predicated region
        $region45: #{tpu_custom_call.1} parent=31 // pred_check
          %p873 = pneg %p260
        $region46: #{tpu_custom_call.1} parent=31 // pred_check_branch
          %875 = sbr.rel (%p873) target = $region48
        $region47: #{tpu_custom_call.1} parent=31 // pred_region
          %v876 = vld [vmem:[#allocation2] sm:$0xff]
          %v877 = vld [vmem:[#allocation2 + $0x8] sm:$0xff]
          %v878 = vld [vmem:[#allocation2 + $0x10] sm:$0xff]
          %v879 = vld [vmem:[#allocation2 + $0x18] sm:$0xff]
          %v880 = vld [vmem:[#allocation2 + $0x20] sm:$0xff]
          %v881 = vld [vmem:[#allocation2 + $0x28] sm:$0xff]
          %v882 = vld [vmem:[#allocation2 + $0x30] sm:$0xff]
          %v883 = vld [vmem:[#allocation2 + $0x38] sm:$0xff]
          %v884 = vld [vmem:[#allocation2 + $0x40] sm:$0xff]
          %v885 = vld [vmem:[#allocation2 + $0x48] sm:$0xff]
          %v886 = vld [vmem:[#allocation2 + $0x50] sm:$0xff]
          %v887 = vld [vmem:[#allocation2 + $0x58] sm:$0xff]
          %v888 = vld [vmem:[#allocation2 + $0x60] sm:$0xff]
          %v889 = vld [vmem:[#allocation2 + $0x68] sm:$0xff]
          %v890 = vld [vmem:[#allocation2 + $0x70] sm:$0xff]
          %v891 = vld [vmem:[#allocation2 + $0x78] sm:$0xff]
          %v892 = vld [vmem:[#allocation2 + $0x80] sm:$0xff]
          %v893 = vld [vmem:[#allocation2 + $0x88] sm:$0xff]
          %v894 = vld [vmem:[#allocation2 + $0x90] sm:$0xff]
          %v895 = vld [vmem:[#allocation2 + $0x98] sm:$0xff]
          %v896 = vld [vmem:[#allocation2 + $0xa0] sm:$0xff]
          %v897 = vld [vmem:[#allocation2 + $0xa8] sm:$0xff]
          %v898 = vld [vmem:[#allocation2 + $0xb0] sm:$0xff]
          %v899 = vld [vmem:[#allocation2 + $0xb8] sm:$0xff]
          %v900 = vld [vmem:[#allocation2 + $0xc0] sm:$0xff]
          %v901 = vld [vmem:[#allocation2 + $0xc8] sm:$0xff]
          %v902 = vld [vmem:[#allocation2 + $0xd0] sm:$0xff]
          %v903 = vld [vmem:[#allocation2 + $0xd8] sm:$0xff]
          %v904 = vld [vmem:[#allocation2 + $0xe0] sm:$0xff]
          %v905 = vld [vmem:[#allocation2 + $0xe8] sm:$0xff]
          %v906 = vld [vmem:[#allocation2 + $0xf0] sm:$0xff]
          %v907 = vld [vmem:[#allocation2 + $0xf8] sm:$0xff]
          %v908 = vld [vmem:[%s257] sm:$0x1]
          %v910 = vlaneseq
          %v911 = vshrl.u32 %v910, 7
          %v912 = vsub.s32 0, %v911
          %v913 = vrot.slane %v908, %v912
          %v915 = vadd.f32 %v876, %v913
          %v916 = vadd.f32 %v877, %v913
          %v917 = vadd.f32 %v878, %v913
          %v918 = vadd.f32 %v879, %v913
          %v919 = vadd.f32 %v880, %v913
          %v920 = vadd.f32 %v881, %v913
          %v921 = vadd.f32 %v882, %v913
          %v922 = vadd.f32 %v883, %v913
          %v923 = vadd.f32 %v884, %v913
          %v924 = vadd.f32 %v885, %v913
          %v925 = vadd.f32 %v886, %v913
          %v926 = vadd.f32 %v887, %v913
          %v927 = vadd.f32 %v888, %v913
          %v928 = vadd.f32 %v889, %v913
          %v929 = vadd.f32 %v890, %v913
          %v930 = vadd.f32 %v891, %v913
          %v931 = vadd.f32 %v892, %v913
          %v932 = vadd.f32 %v893, %v913
          %v933 = vadd.f32 %v894, %v913
          %v934 = vadd.f32 %v895, %v913
          %v935 = vadd.f32 %v896, %v913
          %v936 = vadd.f32 %v897, %v913
          %v937 = vadd.f32 %v898, %v913
          %v938 = vadd.f32 %v899, %v913
          %v939 = vadd.f32 %v900, %v913
          %v940 = vadd.f32 %v901, %v913
          %v941 = vadd.f32 %v902, %v913
          %v942 = vadd.f32 %v903, %v913
          %v943 = vadd.f32 %v904, %v913
          %v944 = vadd.f32 %v905, %v913
          %v945 = vadd.f32 %v906, %v913
          %v946 = vadd.f32 %v907, %v913
          %v947 = vmax.f32 %v915, 0.0
          %v948 = vmax.f32 %v916, 0.0
          %v949 = vmax.f32 %v917, 0.0
          %v950 = vmax.f32 %v918, 0.0
          %v951 = vmax.f32 %v919, 0.0
          %v952 = vmax.f32 %v920, 0.0
          %v953 = vmax.f32 %v921, 0.0
          %v954 = vmax.f32 %v922, 0.0
          %v955 = vmax.f32 %v923, 0.0
          %v956 = vmax.f32 %v924, 0.0
          %v957 = vmax.f32 %v925, 0.0
          %v958 = vmax.f32 %v926, 0.0
          %v959 = vmax.f32 %v927, 0.0
          %v960 = vmax.f32 %v928, 0.0
          %v961 = vmax.f32 %v929, 0.0
          %v962 = vmax.f32 %v930, 0.0
          %v963 = vmax.f32 %v931, 0.0
          %v964 = vmax.f32 %v932, 0.0
          %v965 = vmax.f32 %v933, 0.0
          %v966 = vmax.f32 %v934, 0.0
          %v967 = vmax.f32 %v935, 0.0
          %v968 = vmax.f32 %v936, 0.0
          %v969 = vmax.f32 %v937, 0.0
          %v970 = vmax.f32 %v938, 0.0
          %v971 = vmax.f32 %v939, 0.0
          %v972 = vmax.f32 %v940, 0.0
          %v973 = vmax.f32 %v941, 0.0
          %v974 = vmax.f32 %v942, 0.0
          %v975 = vmax.f32 %v943, 0.0
          %v976 = vmax.f32 %v944, 0.0
          %v977 = vmax.f32 %v945, 0.0
          %v978 = vmax.f32 %v946, 0.0
          %v979 = vpack.c.bf16 %v948, %v947
          %v980 = vpack.c.bf16 %v950, %v949
          %v981 = vpack.c.bf16 %v952, %v951
          %v982 = vpack.c.bf16 %v954, %v953
          %v983 = vpack.c.bf16 %v956, %v955
          %v984 = vpack.c.bf16 %v958, %v957
          %v985 = vpack.c.bf16 %v960, %v959
          %v986 = vpack.c.bf16 %v962, %v961
          %v987 = vpack.c.bf16 %v964, %v963
          %v988 = vpack.c.bf16 %v966, %v965
          %v989 = vpack.c.bf16 %v968, %v967
          %v990 = vpack.c.bf16 %v970, %v969
          %v991 = vpack.c.bf16 %v972, %v971
          %v992 = vpack.c.bf16 %v974, %v973
          %v993 = vpack.c.bf16 %v976, %v975
          %v994 = vpack.c.bf16 %v978, %v977
          %v1011 = vunpack.c.l.b16 %v979
          %v1012 = vunpack.c.h.b16 %v979
          %v1013 = vunpack.c.l.b16 %v980
          %v1014 = vunpack.c.h.b16 %v980
          %v1015 = vunpack.c.l.b16 %v981
          %v1016 = vunpack.c.h.b16 %v981
          %v1017 = vunpack.c.l.b16 %v982
          %v1018 = vunpack.c.h.b16 %v982
          %v1019 = vunpack.c.l.b16 %v983
          %v1020 = vunpack.c.h.b16 %v983
          %v1021 = vunpack.c.l.b16 %v984
          %v1022 = vunpack.c.h.b16 %v984
          %v1023 = vunpack.c.l.b16 %v985
          %v1024 = vunpack.c.h.b16 %v985
          %v1025 = vunpack.c.l.b16 %v986
          %v1026 = vunpack.c.h.b16 %v986
          %v1027 = vunpack.c.l.b16 %v987
          %v1028 = vunpack.c.h.b16 %v987
          %v1029 = vunpack.c.l.b16 %v988
          %v1030 = vunpack.c.h.b16 %v988
          %v1031 = vunpack.c.l.b16 %v989
          %v1032 = vunpack.c.h.b16 %v989
          %v1033 = vunpack.c.l.b16 %v990
          %v1034 = vunpack.c.h.b16 %v990
          %v1035 = vunpack.c.l.b16 %v991
          %v1036 = vunpack.c.h.b16 %v991
          %v1037 = vunpack.c.l.b16 %v992
          %v1038 = vunpack.c.h.b16 %v992
          %v1039 = vunpack.c.l.b16 %v993
          %v1040 = vunpack.c.h.b16 %v993
          %v1041 = vunpack.c.l.b16 %v994
          %v1042 = vunpack.c.h.b16 %v994
          %v1043 = vpack.c.b16 %v1011, %v1011
          %v1044 = vpack.c.b16 %v1012, %v1012
          %v1045 = vpack.c.b16 %v1013, %v1013
          %v1046 = vpack.c.b16 %v1014, %v1014
          %v1047 = vpack.c.b16 %v1015, %v1015
          %v1048 = vpack.c.b16 %v1016, %v1016
          %v1049 = vpack.c.b16 %v1017, %v1017
          %v1050 = vpack.c.b16 %v1018, %v1018
          %v1051 = vpack.c.b16 %v1019, %v1019
          %v1052 = vpack.c.b16 %v1020, %v1020
          %v1053 = vpack.c.b16 %v1021, %v1021
          %v1054 = vpack.c.b16 %v1022, %v1022
          %v1055 = vpack.c.b16 %v1023, %v1023
          %v1056 = vpack.c.b16 %v1024, %v1024
          %v1057 = vpack.c.b16 %v1025, %v1025
          %v1058 = vpack.c.b16 %v1026, %v1026
          %v1059 = vpack.c.b16 %v1027, %v1027
          %v1060 = vpack.c.b16 %v1028, %v1028
          %v1061 = vpack.c.b16 %v1029, %v1029
          %v1062 = vpack.c.b16 %v1030, %v1030
          %v1063 = vpack.c.b16 %v1031, %v1031
          %v1064 = vpack.c.b16 %v1032, %v1032
          %v1065 = vpack.c.b16 %v1033, %v1033
          %v1066 = vpack.c.b16 %v1034, %v1034
          %v1067 = vpack.c.b16 %v1035, %v1035
          %v1068 = vpack.c.b16 %v1036, %v1036
          %v1069 = vpack.c.b16 %v1037, %v1037
          %v1070 = vpack.c.b16 %v1038, %v1038
          %v1071 = vpack.c.b16 %v1039, %v1039
          %v1072 = vpack.c.b16 %v1040, %v1040
          %v1073 = vpack.c.b16 %v1041, %v1041
          %v1074 = vpack.c.b16 %v1042, %v1042
          %1107 = vst [vmem:[%s251] sm:$0xf] %v1043
          %1108 = vst [vmem:[%s251 + $0x4] sm:$0xf] %v1044
          %1109 = vst [vmem:[%s251 + $0x8] sm:$0xf] %v1045
          %1110 = vst [vmem:[%s251 + $0xc] sm:$0xf] %v1046
          %1111 = vst [vmem:[%s251 + $0x10] sm:$0xf] %v1047
          %1112 = vst [vmem:[%s251 + $0x14] sm:$0xf] %v1048
          %1113 = vst [vmem:[%s251 + $0x18] sm:$0xf] %v1049
          %1114 = vst [vmem:[%s251 + $0x1c] sm:$0xf] %v1050
          %1115 = vst [vmem:[%s251 + $0x20] sm:$0xf] %v1051
          %1116 = vst [vmem:[%s251 + $0x24] sm:$0xf] %v1052
          %1117 = vst [vmem:[%s251 + $0x28] sm:$0xf] %v1053
          %1118 = vst [vmem:[%s251 + $0x2c] sm:$0xf] %v1054
          %1119 = vst [vmem:[%s251 + $0x30] sm:$0xf] %v1055
          %1120 = vst [vmem:[%s251 + $0x34] sm:$0xf] %v1056
          %1121 = vst [vmem:[%s251 + $0x38] sm:$0xf] %v1057
          %1122 = vst [vmem:[%s251 + $0x3c] sm:$0xf] %v1058
          %1123 = vst [vmem:[%s251 + $0x40] sm:$0xf] %v1059
          %1124 = vst [vmem:[%s251 + $0x44] sm:$0xf] %v1060
          %1125 = vst [vmem:[%s251 + $0x48] sm:$0xf] %v1061
          %1126 = vst [vmem:[%s251 + $0x4c] sm:$0xf] %v1062
          %1127 = vst [vmem:[%s251 + $0x50] sm:$0xf] %v1063
          %1128 = vst [vmem:[%s251 + $0x54] sm:$0xf] %v1064
          %1129 = vst [vmem:[%s251 + $0x58] sm:$0xf] %v1065
          %1130 = vst [vmem:[%s251 + $0x5c] sm:$0xf] %v1066
          %1131 = vst [vmem:[%s251 + $0x60] sm:$0xf] %v1067
          %1132 = vst [vmem:[%s251 + $0x64] sm:$0xf] %v1068
          %1133 = vst [vmem:[%s251 + $0x68] sm:$0xf] %v1069
          %1134 = vst [vmem:[%s251 + $0x6c] sm:$0xf] %v1070
          %1135 = vst [vmem:[%s251 + $0x70] sm:$0xf] %v1071
          %1136 = vst [vmem:[%s251 + $0x74] sm:$0xf] %v1072
          %1137 = vst [vmem:[%s251 + $0x78] sm:$0xf] %v1073
          %1138 = vst [vmem:[%s251 + $0x7c] sm:$0xf] %v1074
        $region48: #{tpu_custom_call.1} parent=31 // pred_fallthru
          _
        %s1139 = sand.u32 %s132, 1
        %s1140 = scalar_lea.sflag [#allocation5], %s1139
        %s1141 = sand.u32 %s132, 1
        %s1142 = smul.addr %s1141, 128
        %s1143 = scalar_lea.vmem [#allocation8], %s1142
        // Predicated region
        $region49: #{tpu_custom_call.1} parent=31 // pred_check
          %p1144 = pneg %p142
        $region50: #{tpu_custom_call.1} parent=31 // pred_check_branch
          %1146 = sbr.rel (%p1144) target = $region52
        $region51: #{tpu_custom_call.1} parent=31 // pred_region
          %s1147 = smul.u32 32, %s26
          %s1149 = ssub.s32 2048, 2048
          %1150 = vsyncadd %s1140, %s1149
          %s1151 = sadd.s32 %s27, %s1147
          %s1152 = smul.addr %s1151, 64
          %s1153 = scalar_lea.hbm %s3, %s1152
          %s1154 = sshll.u32 %s1143, 4
          %s1155 = int_to_ptr.vmem [resolvable:$true] %s1154
          %1160 = dma.vmem_to_hbm [thread:$0]  %s1155, 2048, %s1153, %s1140, 64, 64, 4
        $region52: #{tpu_custom_call.1} parent=31 // pred_fallthru
          _
      $region32: #{tpu_custom_call.1} parent=5 // pred_fallthru
        _
      %p1161 = scmp.le.s32.totalorder 2, %s16
      // Predicated region
      $region53: #{tpu_custom_call.1} parent=5 // pred_check
        %p1162 = pneg %p1161
      $region54: #{tpu_custom_call.1} parent=5 // pred_check_branch
        %1164 = sbr.rel (%p1162) target = $region56
      $region55: #{tpu_custom_call.1} parent=5 // pred_region
        %s1165 = ssub.s32 %s16, 2
        // Predicated region
        $region57: #{tpu_custom_call.1} parent=55 // pred_check
          %p1166 = pneg %p148
        $region58: #{tpu_custom_call.1} parent=55 // pred_check_branch
          %1168 = sbr.rel (%p1166) target = $region60
        $region59: #{tpu_custom_call.1} parent=55 // pred_region
          %s1169 = sand.u32 %s133, 1
          %s1170 = scalar_lea.sflag [#allocation5], %s1169
          %s1171 = sand.u32 %s133, 1
          %s1172 = smul.addr %s1171, 128
          %s1173 = scalar_lea.vmem [#allocation8], %s1172
          %1174 = dma.done %s1170, 2048
        $region60: #{tpu_custom_call.1} parent=55 // pred_fallthru
          _
      $region56: #{tpu_custom_call.1} parent=5 // pred_fallthru
        _
    $region6: #{tpu_custom_call.1} parent=1 // loop_footer
      %s20 = sadd.s32 1, %s16
    $region7: #{tpu_custom_call.1} parent=1 // loop_footer_branch
      %15 = sbr.rel target = $region3
    $region8: #{tpu_custom_call.1} parent=1 // loop_exit
      _
    %1175 = vsyncpa [#allocation4], 1
    %s1176 = scalar_lea.sflag [#allocation4], 1
    %1177 = vsyncpa %s1176, 1
    %1178 = vsyncpa [#allocation7], 1
    %1179 = vsyncpa [#allocation5], 1
    %s1180 = scalar_lea.sflag [#allocation5], 1
    %1181 = vsyncpa %s1180, 1

</llo_original>
